<compile_context>
chip_gen: v7x
topology: tpu7x:2x2x1
jax: 0.10.0
libtpu: 0.0.40
codegen_flags: <defaults>
</compile_context>

<pallas_src>
import functools

import jax
import jax.numpy as jnp
from jax.experimental import pallas as pl
from jax.experimental.pallas import tpu as pltpu

# config.* constants from the original repo (deterministic, in-script)
TOP_K = 12
OBS_RADIUS = 1.0

TM = 256  # lane tile over flattened agent-neighbor pairs (multiple of 128)
          # widest live intermediate is (128, TM) f32 = TM/8 vregs -> no spill


def cbf_mlp_kernel(x_ref, w1_ref, b1_ref, w2_ref, b2_ref, w3_ref, b3_ref,
                   w4_ref, b4_ref, out_ref, *, obs_radius):
    x = x_ref[...]                                     # (6, TM) f32, channel-major

    # dist = sqrt(x0^2 + 1e-4 + x1^2 + 1e-4)   (exact torch op order)
    dist = jnp.sqrt((x[0:1, :] ** 2 + 1e-4) + (x[1:2, :] ** 2 + 1e-4))  # (1, TM)
    mask = (dist <= obs_radius).astype(jnp.float32)                     # (1, TM)

    # Pointwise-conv MLP 6 -> 64 -> 128 -> 64 -> 1, all as W @ X (lane-dense).
    # (bf16 weights would halve DMA/vreg pressure on v6e/v7x; kept f32 here
    #  for bit-tight parity with the f32 reference.)
    h = jnp.dot(w1_ref[...], x, preferred_element_type=jnp.float32) + b1_ref[...]
    h = jnp.maximum(h, 0.0)                                             # (64, TM)
    h = jnp.dot(w2_ref[...], h, preferred_element_type=jnp.float32) + b2_ref[...]
    h = jnp.maximum(h, 0.0)                                             # (128, TM)
    h = jnp.dot(w3_ref[...], h, preferred_element_type=jnp.float32) + b3_ref[...]
    h = jnp.maximum(h, 0.0)                                             # (64, TM)
    h = jnp.dot(w4_ref[...], h, preferred_element_type=jnp.float32) + b4_ref[...]
    # h: (1, TM)

    out_ref[...] = jnp.concatenate([h * mask, mask], axis=0)            # (2, TM)


def cbf_mlp_pallas(x_cm, params, obs_radius):
    """x_cm: (6, M) f32 channel-major -> (h*mask (M,), mask (M,))."""
    w1, b1, w2, b2, w3, b3, w4, b4 = params
    m = x_cm.shape[1]
    m_pad = ((m + TM - 1) // TM) * TM
    x_p = jnp.pad(x_cm, ((0, 0), (0, m_pad - m)))

    full = lambda i: (0, 0)
    col = lambda i: (0, i)

    out = pl.pallas_call(
        functools.partial(cbf_mlp_kernel, obs_radius=obs_radius),
        out_shape=jax.ShapeDtypeStruct((2, m_pad), jnp.float32),
        grid_spec=pltpu.PrefetchScalarGridSpec(
            num_scalar_prefetch=0,
            grid=(m_pad // TM,),
            in_specs=[
                pl.BlockSpec((6, TM), col),
                pl.BlockSpec((64, 6), full), pl.BlockSpec((64, 1), full),
                pl.BlockSpec((128, 64), full), pl.BlockSpec((128, 1), full),
                pl.BlockSpec((64, 128), full), pl.BlockSpec((64, 1), full),
                pl.BlockSpec((1, 64), full), pl.BlockSpec((1, 1), full),
            ],
            out_specs=pl.BlockSpec((2, TM), col),
        ),
        compiler_params=pltpu.CompilerParams(
            dimension_semantics=("parallel",)),
    )(x_p, w1, b1, w2, b2, w3, b3, w4, b4)

    # Padded columns (m..m_pad) produce mask=1 and nonzero h; slicing them off
    # here is required for correctness.
    return out[0, :m], out[1, :m]


def network_cbf_forward(x, r, params, indices=None):
    """x: (N, N, 4) f32, r: scalar.  Returns (h (N,K,1), mask (N,K,1), indices)."""
    n = x.shape[0]
    if indices is not None:
        # TODO(synk): precomputed-`indices` fast path (x = x[indices]) not reproduced.
        raise NotImplementedError("indices fast path not supported")

    # remove_distant_agents (glue: data-dependent top-k gather on the raw x)
    if n <= TOP_K:
        xk = x                                                          # (N, N, 4)
        eye_k = jnp.eye(n, dtype=x.dtype)                               # (N, N)
        idx_out = False
    else:
        dn = jnp.sqrt(jnp.sum(jnp.square(x[:, :, :2]) + 1e-6, axis=2))  # (N, N)
        _, topk_idx = jax.lax.top_k(-dn, TOP_K)                         # (N, K)
        xk = jnp.take_along_axis(x, topk_idx[:, :, None], axis=1)       # (N, K, 4)
        eye_k = (topk_idx == jnp.arange(n)[:, None]).astype(x.dtype)    # (N, K)
        rows = jnp.repeat(jnp.arange(n), TOP_K).reshape(-1, 1)
        cols = topk_idx.reshape(-1, 1)
        idx_out = jnp.concatenate([rows, cols], axis=1)                 # (N*K, 2)

    k = xk.shape[1]
    # Feature construction on the gathered pairs only: O(N*K), channel-major.
    d_norm_k = jnp.sqrt(jnp.sum(jnp.square(xk[:, :, :2]) + 1e-4, axis=2))     # (N, K)
    feat = jnp.stack([xk[:, :, 0], xk[:, :, 1], xk[:, :, 2], xk[:, :, 3],
                      eye_k, d_norm_k - r], axis=0)                           # (6, N, K)

    out_flat, mask_flat = cbf_mlp_pallas(feat.reshape(6, n * k), params, OBS_RADIUS)
    return out_flat.reshape(n, k, 1), mask_flat.reshape(n, k, 1), idx_out


def _ref_forward(x, r, params):
    """Pure-JAX reference (faithful mirror of the PyTorch forward)."""
    w1, b1, w2, b2, w3, b3, w4, b4 = params   # w: (out_ch, in_ch), b: (out_ch, 1)
    n = x.shape[0]
    d_norm = jnp.sqrt(jnp.sum(jnp.square(x[:, :, :2]) + 1e-4, axis=2))
    eye = jnp.eye(n, dtype=x.dtype)[:, :, None]
    x6 = jnp.concatenate([x, eye, d_norm[:, :, None] - r], axis=-1)
    if n > TOP_K:
        dn = jnp.sqrt(jnp.sum(jnp.square(x6[:, :, :2]) + 1e-6, axis=2))
        _, topk_idx = jax.lax.top_k(-dn, TOP_K)
        x6 = jnp.take_along_axis(x6, topk_idx[:, :, None], axis=1)
    dist = jnp.sqrt(jnp.sum(x6[..., :2] ** 2 + 1e-4, axis=-1, keepdims=True))
    mask = (dist <= OBS_RADIUS).astype(jnp.float32)
    h = jax.nn.relu(x6 @ w1.T + b1.T)
    h = jax.nn.relu(h @ w2.T + b2.T)
    h = jax.nn.relu(h @ w3.T + b3.T)
    h = h @ w4.T + b4.T
    return h * mask, mask


def init_params(key):
    """Deterministic init.  Weights stored (out_ch, in_ch) (torch Conv1d order);
    biases stored (out_ch, 1)."""
    shapes = [(64, 6), (128, 64), (64, 128), (1, 64)]
    keys = jax.random.split(key, 2 * len(shapes))
    params = []
    for i, (fan_out, fan_in) in enumerate(shapes):
        bound = 1.0 / (fan_in ** 0.5)
        w = jax.random.uniform(keys[2 * i], (fan_out, fan_in), jnp.float32,
                               -bound, bound)
        b = jax.random.uniform(keys[2 * i + 1], (fan_out, 1), jnp.float32,
                               -bound, bound)
        params += [w, b]
    return tuple(params)


if __name__ == "__main__":
    key = jax.random.PRNGKey(0)
    kx, kp = jax.random.split(key)

    N = 16          # agents (> TOP_K=12, so the top-k neighbor path is exercised)
    r = 0.5         # scalar radius offset

    x = jax.random.normal(kx, (N, N, 4), jnp.float32)
    params = init_params(kp)

    h, mask, idx = network_cbf_forward(x, r, params)
    jax.block_until_ready((h, mask))

    h_ref, mask_ref = _ref_forward(x, r, params)
    assert h.shape == (N, TOP_K, 1) and mask.shape == (N, TOP_K, 1)
    assert jnp.allclose(mask, mask_ref)
    assert jnp.allclose(h, h_ref, rtol=1e-2, atol=1e-2)

    print("KERNEL_OK")
</pallas_src>

<mosaic_0001>
module attributes {stable_mosaic.version = 11 : i64} {
  func.func @cbf_mlp_kernel(%arg0: i32, %arg1: memref<6x256xf32, #tpu.memory_space<vmem>>, %arg2: memref<64x6xf32, #tpu.memory_space<vmem>>, %arg3: memref<64x1xf32, #tpu.memory_space<vmem>>, %arg4: memref<128x64xf32, #tpu.memory_space<vmem>>, %arg5: memref<128x1xf32, #tpu.memory_space<vmem>>, %arg6: memref<64x128xf32, #tpu.memory_space<vmem>>, %arg7: memref<64x1xf32, #tpu.memory_space<vmem>>, %arg8: memref<1x64xf32, #tpu.memory_space<vmem>>, %arg9: memref<1x1xf32, #tpu.memory_space<vmem>>, %arg10: memref<2x256xf32, #tpu.memory_space<vmem>>) attributes {dimension_semantics = [#tpu.dimension_semantics<parallel>], iteration_bounds = array<i64: 1>, scalar_prefetch = 0 : i64, scratch_operands = 0 : i64, tpu.core_type = #tpu.core_type<tc>, window_params = [{transform_indices = @transform_0, window_bounds = array<i64: 6, 256>}, {pipeline_mode = #tpu.pipeline_mode<synchronous>, transform_indices = @transform_1, window_bounds = array<i64: 64, 6>}, {pipeline_mode = #tpu.pipeline_mode<synchronous>, transform_indices = @transform_2, window_bounds = array<i64: 64, 1>}, {pipeline_mode = #tpu.pipeline_mode<synchronous>, transform_indices = @transform_3, window_bounds = array<i64: 128, 64>}, {pipeline_mode = #tpu.pipeline_mode<synchronous>, transform_indices = @transform_4, window_bounds = array<i64: 128, 1>}, {pipeline_mode = #tpu.pipeline_mode<synchronous>, transform_indices = @transform_5, window_bounds = array<i64: 64, 128>}, {pipeline_mode = #tpu.pipeline_mode<synchronous>, transform_indices = @transform_6, window_bounds = array<i64: 64, 1>}, {pipeline_mode = #tpu.pipeline_mode<synchronous>, transform_indices = @transform_7, window_bounds = array<i64: 1, 64>}, {pipeline_mode = #tpu.pipeline_mode<synchronous>, transform_indices = @transform_8, window_bounds = array<i64: 1, 1>}, {transform_indices = @transform_9, window_bounds = array<i64: 2, 256>}]} {
    %c0 = arith.constant 0 : index
    %c0_0 = arith.constant 0 : index
    %0 = vector.load %arg1[%c0, %c0_0] : memref<6x256xf32, #tpu.memory_space<vmem>>, vector<6x256xf32>
    %1 = vector.extract_strided_slice %0 {offsets = [0, 0], sizes = [1, 256], strides = [1, 1]} : vector<6x256xf32> to vector<1x256xf32>
    %2 = arith.mulf %1, %1 : vector<1x256xf32>
    %cst = arith.constant 9.99999974E-5 : f32
    %3 = vector.broadcast %cst : f32 to vector<1x256xf32>
    %4 = arith.addf %2, %3 : vector<1x256xf32>
    %5 = vector.extract_strided_slice %0 {offsets = [1, 0], sizes = [1, 256], strides = [1, 1]} : vector<6x256xf32> to vector<1x256xf32>
    %6 = arith.mulf %5, %5 : vector<1x256xf32>
    %cst_1 = arith.constant 9.99999974E-5 : f32
    %7 = vector.broadcast %cst_1 : f32 to vector<1x256xf32>
    %8 = arith.addf %6, %7 : vector<1x256xf32>
    %9 = arith.addf %4, %8 : vector<1x256xf32>
    %10 = math.sqrt %9 : vector<1x256xf32>
    %cst_2 = arith.constant 1.000000e+00 : f32
    %11 = vector.broadcast %cst_2 : f32 to vector<1x256xf32>
    %12 = arith.cmpf ole, %10, %11 : vector<1x256xf32>
    %13 = arith.extui %12 : vector<1x256xi1> to vector<1x256xi32>
    %14 = arith.sitofp %13 : vector<1x256xi32> to vector<1x256xf32>
    %c0_3 = arith.constant 0 : index
    %c0_4 = arith.constant 0 : index
    %15 = vector.load %arg2[%c0_3, %c0_4] : memref<64x6xf32, #tpu.memory_space<vmem>>, vector<64x6xf32>
    %cst_5 = arith.constant dense<0.000000e+00> : vector<64x256xf32>
    %16 = tpu.matmul %15, %0, %cst_5 {dimension_numbers = #tpu.dot_dimension_numbers<[1], [0], [0], [1], [0, 0, 1, 1], [], []>} : vector<64x6xf32>, vector<6x256xf32>, vector<64x256xf32> -> vector<64x256xf32>
    %c0_6 = arith.constant 0 : index
    %c0_7 = arith.constant 0 : index
    %17 = vector.load %arg3[%c0_6, %c0_7] : memref<64x1xf32, #tpu.memory_space<vmem>>, vector<64x1xf32>
    %18 = vector.broadcast %17 : vector<64x1xf32> to vector<64x256xf32>
    %19 = arith.addf %16, %18 : vector<64x256xf32>
    %cst_8 = arith.constant 0.000000e+00 : f32
    %20 = vector.broadcast %cst_8 : f32 to vector<64x256xf32>
    %21 = arith.maximumf %19, %20 : vector<64x256xf32>
    %c0_9 = arith.constant 0 : index
    %c0_10 = arith.constant 0 : index
    %22 = vector.load %arg4[%c0_9, %c0_10] : memref<128x64xf32, #tpu.memory_space<vmem>>, vector<128x64xf32>
    %cst_11 = arith.constant dense<0.000000e+00> : vector<128x256xf32>
    %23 = tpu.matmul %22, %21, %cst_11 {dimension_numbers = #tpu.dot_dimension_numbers<[1], [0], [0], [1], [0, 0, 1, 1], [], []>} : vector<128x64xf32>, vector<64x256xf32>, vector<128x256xf32> -> vector<128x256xf32>
    %c0_12 = arith.constant 0 : index
    %c0_13 = arith.constant 0 : index
    %24 = vector.load %arg5[%c0_12, %c0_13] : memref<128x1xf32, #tpu.memory_space<vmem>>, vector<128x1xf32>
    %25 = vector.broadcast %24 : vector<128x1xf32> to vector<128x256xf32>
    %26 = arith.addf %23, %25 : vector<128x256xf32>
    %cst_14 = arith.constant 0.000000e+00 : f32
    %27 = vector.broadcast %cst_14 : f32 to vector<128x256xf32>
    %28 = arith.maximumf %26, %27 : vector<128x256xf32>
    %c0_15 = arith.constant 0 : index
    %c0_16 = arith.constant 0 : index
    %29 = vector.load %arg6[%c0_15, %c0_16] : memref<64x128xf32, #tpu.memory_space<vmem>>, vector<64x128xf32>
    %cst_17 = arith.constant dense<0.000000e+00> : vector<64x256xf32>
    %30 = tpu.matmul %29, %28, %cst_17 {dimension_numbers = #tpu.dot_dimension_numbers<[1], [0], [0], [1], [0, 0, 1, 1], [], []>} : vector<64x128xf32>, vector<128x256xf32>, vector<64x256xf32> -> vector<64x256xf32>
    %c0_18 = arith.constant 0 : index
    %c0_19 = arith.constant 0 : index
    %31 = vector.load %arg7[%c0_18, %c0_19] : memref<64x1xf32, #tpu.memory_space<vmem>>, vector<64x1xf32>
    %32 = vector.broadcast %31 : vector<64x1xf32> to vector<64x256xf32>
    %33 = arith.addf %30, %32 : vector<64x256xf32>
    %cst_20 = arith.constant 0.000000e+00 : f32
    %34 = vector.broadcast %cst_20 : f32 to vector<64x256xf32>
    %35 = arith.maximumf %33, %34 : vector<64x256xf32>
    %c0_21 = arith.constant 0 : index
    %c0_22 = arith.constant 0 : index
    %36 = vector.load %arg8[%c0_21, %c0_22] : memref<1x64xf32, #tpu.memory_space<vmem>>, vector<1x64xf32>
    %cst_23 = arith.constant dense<0.000000e+00> : vector<1x256xf32>
    %37 = tpu.matmul %36, %35, %cst_23 {dimension_numbers = #tpu.dot_dimension_numbers<[1], [0], [0], [1], [0, 0, 1, 1], [], []>} : vector<1x64xf32>, vector<64x256xf32>, vector<1x256xf32> -> vector<1x256xf32>
    %c0_24 = arith.constant 0 : index
    %c0_25 = arith.constant 0 : index
    %38 = vector.load %arg9[%c0_24, %c0_25] : memref<1x1xf32, #tpu.memory_space<vmem>>, vector<1x1xf32>
    %39 = vector.broadcast %38 : vector<1x1xf32> to vector<1x256xf32>
    %40 = arith.addf %37, %39 : vector<1x256xf32>
    %41 = arith.mulf %40, %14 : vector<1x256xf32>
    %42 = tpu.concatenate %41, %14 in 0 : vector<1x256xf32>, vector<1x256xf32> -> vector<2x256xf32>
    %c0_26 = arith.constant 0 : index
    %c0_27 = arith.constant 0 : index
    %43 = vector.load %arg10[%c0_26, %c0_27] : memref<2x256xf32, #tpu.memory_space<vmem>>, vector<2x256xf32>
    tpu.vector_store %arg10[%c0_26, %c0_27], %42 {strides = array<i32>} : memref<2x256xf32, #tpu.memory_space<vmem>>, vector<2x256xf32>,
    return
  }
  func.func @transform_0(%arg0: i32) -> (i32, i32) {
    %c0_i32 = arith.constant 0 : i32
    %c0_i32_0 = arith.constant 0 : i32
    return %c0_i32, %arg0 : i32, i32
  }
  func.func @transform_1(%arg0: i32) -> (i32, i32) {
    %c0_i32 = arith.constant 0 : i32
    %c0_i32_0 = arith.constant 0 : i32
    %c0_i32_1 = arith.constant 0 : i32
    return %c0_i32, %c0_i32_0 : i32, i32
  }
  func.func @transform_2(%arg0: i32) -> (i32, i32) {
    %c0_i32 = arith.constant 0 : i32
    %c0_i32_0 = arith.constant 0 : i32
    %c0_i32_1 = arith.constant 0 : i32
    return %c0_i32, %c0_i32_0 : i32, i32
  }
  func.func @transform_3(%arg0: i32) -> (i32, i32) {
    %c0_i32 = arith.constant 0 : i32
    %c0_i32_0 = arith.constant 0 : i32
    %c0_i32_1 = arith.constant 0 : i32
    return %c0_i32, %c0_i32_0 : i32, i32
  }
  func.func @transform_4(%arg0: i32) -> (i32, i32) {
    %c0_i32 = arith.constant 0 : i32
    %c0_i32_0 = arith.constant 0 : i32
    %c0_i32_1 = arith.constant 0 : i32
    return %c0_i32, %c0_i32_0 : i32, i32
  }
  func.func @transform_5(%arg0: i32) -> (i32, i32) {
    %c0_i32 = arith.constant 0 : i32
    %c0_i32_0 = arith.constant 0 : i32
    %c0_i32_1 = arith.constant 0 : i32
    return %c0_i32, %c0_i32_0 : i32, i32
  }
  func.func @transform_6(%arg0: i32) -> (i32, i32) {
    %c0_i32 = arith.constant 0 : i32
    %c0_i32_0 = arith.constant 0 : i32
    %c0_i32_1 = arith.constant 0 : i32
    return %c0_i32, %c0_i32_0 : i32, i32
  }
  func.func @transform_7(%arg0: i32) -> (i32, i32) {
    %c0_i32 = arith.constant 0 : i32
    %c0_i32_0 = arith.constant 0 : i32
    %c0_i32_1 = arith.constant 0 : i32
    return %c0_i32, %c0_i32_0 : i32, i32
  }
  func.func @transform_8(%arg0: i32) -> (i32, i32) {
    %c0_i32 = arith.constant 0 : i32
    %c0_i32_0 = arith.constant 0 : i32
    %c0_i32_1 = arith.constant 0 : i32
    return %c0_i32, %c0_i32_0 : i32, i32
  }
  func.func @transform_9(%arg0: i32) -> (i32, i32) {
    %c0_i32 = arith.constant 0 : i32
    %c0_i32_0 = arith.constant 0 : i32
    return %c0_i32, %arg0 : i32, i32
  }
}

</mosaic_0001>

<llo_original>
// kernel: tpu_custom_call.1
$region0: #{tpu_custom_call.1}
  #allocation0 [shape = 'u32[]', space=smem, size = 0x4, offset = 0x4, fixed_abs, tag = 'smem constant byte address 0x4 - core index']
  #allocation1 [shape = 'u32[144,128]{1,0:T(1,128)}', space=vmem, size = 0x12000, scoped, tag = 'internal scratch']
  #allocation2 [shape = 'f32[1,1]{1,0:T(1,128)S(1)}', space=vmem, size = 0x200, scoped, tag = 'scoped memory for tpu_custom_call.1']
  %s0 = inlined_call_operand.vmem [shape: f32[6,256], index: 0, kind: input, shape index: {}]
  %s1 = inlined_call_operand.vmem [shape: f32[64,6], index: 1, kind: input, shape index: {}]
  %s2 = inlined_call_operand.vmem [shape: f32[64,1], index: 2, kind: input, shape index: {}]
  %s3 = inlined_call_operand.vmem [shape: f32[128,64], index: 3, kind: input, shape index: {}]
  %s4 = inlined_call_operand.vmem [shape: f32[128,1], index: 4, kind: input, shape index: {}]
  %s5 = inlined_call_operand.vmem [shape: f32[64,128], index: 5, kind: input, shape index: {}]
  %s6 = inlined_call_operand.vmem [shape: f32[64,1], index: 6, kind: input, shape index: {}]
  %s7 = inlined_call_operand.vmem [shape: f32[1,64], index: 7, kind: input, shape index: {}]
  %s8 = inlined_call_operand.<no memory space> [shape: f32[1,1], index: 8, kind: input, shape index: {}]
  %s9 = inlined_call_operand.hbm [shape: f32[2,256], index: 9, kind: output, shape index: {}]
  %s10 = sld [smem:[#allocation0]]
  $region46: #{tpu_custom_call.1} parent=0
    _
  %s12 = ssub.s32 1, %s10
  %s13 = scalar_select 0, %s12, %s10
  %v14 = vstv %s8
  %15 = vst [vmem:[#allocation2] sm:$0x1] %v14
  $region1: #{tpu_custom_call.1} parent=0
    #allocation3 [shape = 'u8[2048]{0}', space=vmem, size = 0x800, scoped, tag = 'output window, operand 0, single buffered']
    #allocation4 [shape = 's32[1]{0}', space=sflag, size = 0x4, scoped, tag = 'scoped memory for tpu_custom_call.1']
    %16 = vsyncpa [#allocation4], 0
    // Predicated region
    $region2: #{tpu_custom_call.1} parent=1 // pred_check
      _
    $region3: #{tpu_custom_call.1} parent=1 // pred_check_branch
      %18 = sbr.rel (0) target = $region5
    $region4: #{tpu_custom_call.1} parent=1 // pred_region
      _
    $region5: #{tpu_custom_call.1} parent=1 // pred_fallthru
      _
    // Predicated region
    $region6: #{tpu_custom_call.1} parent=1 // pred_check
      _
    $region7: #{tpu_custom_call.1} parent=1 // pred_check_branch
      %20 = sbr.rel (0) target = $region9
    $region8: #{tpu_custom_call.1} parent=1 // pred_region
      _
    $region9: #{tpu_custom_call.1} parent=1 // pred_fallthru
      _
    // Predicated region
    $region10: #{tpu_custom_call.1} parent=1 // pred_check
      _
    $region11: #{tpu_custom_call.1} parent=1 // pred_check_branch
      %22 = sbr.rel (0) target = $region13
    $region12: #{tpu_custom_call.1} parent=1 // pred_region
      _
    $region13: #{tpu_custom_call.1} parent=1 // pred_fallthru
      _
    // Predicated region
    $region14: #{tpu_custom_call.1} parent=1 // pred_check
      _
    $region15: #{tpu_custom_call.1} parent=1 // pred_check_branch
      %24 = sbr.rel (0) target = $region17
    $region16: #{tpu_custom_call.1} parent=1 // pred_region
      _
    $region17: #{tpu_custom_call.1} parent=1 // pred_fallthru
      _
    // Predicated region
    $region18: #{tpu_custom_call.1} parent=1 // pred_check
      _
    $region19: #{tpu_custom_call.1} parent=1 // pred_check_branch
      %26 = sbr.rel (0) target = $region21
    $region20: #{tpu_custom_call.1} parent=1 // pred_region
      _
    $region21: #{tpu_custom_call.1} parent=1 // pred_fallthru
      _
    // Predicated region
    $region22: #{tpu_custom_call.1} parent=1 // pred_check
      _
    $region23: #{tpu_custom_call.1} parent=1 // pred_check_branch
      %28 = sbr.rel (0) target = $region25
    $region24: #{tpu_custom_call.1} parent=1 // pred_region
      _
    $region25: #{tpu_custom_call.1} parent=1 // pred_fallthru
      _
    // Predicated region
    $region26: #{tpu_custom_call.1} parent=1 // pred_check
      _
    $region27: #{tpu_custom_call.1} parent=1 // pred_check_branch
      %30 = sbr.rel (0) target = $region29
    $region28: #{tpu_custom_call.1} parent=1 // pred_region
      _
    $region29: #{tpu_custom_call.1} parent=1 // pred_fallthru
      _
    // Predicated region
    $region30: #{tpu_custom_call.1} parent=1 // pred_check
      _
    $region31: #{tpu_custom_call.1} parent=1 // pred_check_branch
      %32 = sbr.rel (0) target = $region33
    $region32: #{tpu_custom_call.1} parent=1 // pred_region
      _
    $region33: #{tpu_custom_call.1} parent=1 // pred_fallthru
      _
    // Predicated region
    $region34: #{tpu_custom_call.1} parent=1 // pred_check
      _
    $region35: #{tpu_custom_call.1} parent=1 // pred_check_branch
      %34 = sbr.rel (0) target = $region37
    $region36: #{tpu_custom_call.1} parent=1 // pred_region
      _
    $region37: #{tpu_custom_call.1} parent=1 // pred_fallthru
      _
    %v35 = vld [vmem:[%s0] sm:$0x3f]
    %v36 = vld [vmem:[%s0 + $0x8] sm:$0x3f]
    %v37 = vmul.f32 %v35, %v35
    %v38 = vmul.f32 %v36, %v36
    %v39 = vadd.f32 %v37, 0.0001
    %v40 = vadd.f32 %v38, 0.0001
    %v43 = vrot.slane %v39, 1
    %v44 = vrot.slane %v40, 1
    %v47 = vadd.f32 %v39, %v43
    %v48 = vadd.f32 %v40, %v44
    %v49 = vrsqrt.pop %v47
    %v50 = vmul.f32 %v47, %v49
    %vm51 = vcmp.eq.f32.partialorder %v47, inf
    %v52 = vsel %vm51, %v47, %v50
    %vm53 = vcmp.eq.f32.partialorder %v47, 0.0
    %v54 = vand.u32 %v47, 2147483648
    %v55 = vsel %vm53, %v54, %v52
    %v56 = vrsqrt.pop %v48
    %v57 = vmul.f32 %v48, %v56
    %vm58 = vcmp.eq.f32.partialorder %v48, inf
    %v59 = vsel %vm58, %v48, %v57
    %vm60 = vcmp.eq.f32.partialorder %v48, 0.0
    %v61 = vand.u32 %v48, 2147483648
    %v62 = vsel %vm60, %v61, %v59
    %vm63 = vcmp.le.f32.partialorder %v55, 1.0
    %vm64 = vcmp.le.f32.partialorder %v62, 1.0
    %v65 = vsel %vm63, 1, 0
    %v66 = vsel %vm64, 1, 0
    %v67 = vcvt.s32.f32 %v65
    %v68 = vcvt.s32.f32 %v66
    %v69 = vld [vmem:[%s1] sm:$0xff]
    %v70 = vld [vmem:[%s1 + $0x8] sm:$0xff]
    %v71 = vld [vmem:[%s1 + $0x10] sm:$0xff]
    %v72 = vld [vmem:[%s1 + $0x18] sm:$0xff]
    %v73 = vld [vmem:[%s1 + $0x20] sm:$0xff]
    %v74 = vld [vmem:[%s1 + $0x28] sm:$0xff]
    %v75 = vld [vmem:[%s1 + $0x30] sm:$0xff]
    %v76 = vld [vmem:[%s1 + $0x38] sm:$0xff]
    %v77 = vld [vmem:[%s2] sm:$0xff]
    %v78 = vld [vmem:[%s2 + $0x8] sm:$0xff]
    %v79 = vld [vmem:[%s2 + $0x10] sm:$0xff]
    %v80 = vld [vmem:[%s2 + $0x18] sm:$0xff]
    %v81 = vld [vmem:[%s2 + $0x20] sm:$0xff]
    %v82 = vld [vmem:[%s2 + $0x28] sm:$0xff]
    %v83 = vld [vmem:[%s2 + $0x30] sm:$0xff]
    %v84 = vld [vmem:[%s2 + $0x38] sm:$0xff]
    %86 = vset.pattern.permute.xlu0 0
    %87 = vperm.xlu0 %86, %v77
    %v88 = vpop.permute.xlu0 %87
    %91 = vset.pattern.permute.xlu0 0
    %92 = vperm.xlu0 %91, %v78
    %v93 = vpop.permute.xlu0 %92
    %96 = vset.pattern.permute.xlu0 0
    %97 = vperm.xlu0 %96, %v79
    %v98 = vpop.permute.xlu0 %97
    %101 = vset.pattern.permute.xlu0 0
    %102 = vperm.xlu0 %101, %v80
    %v103 = vpop.permute.xlu0 %102
    %106 = vset.pattern.permute.xlu0 0
    %107 = vperm.xlu0 %106, %v81
    %v108 = vpop.permute.xlu0 %107
    %111 = vset.pattern.permute.xlu0 0
    %112 = vperm.xlu0 %111, %v82
    %v113 = vpop.permute.xlu0 %112
    %116 = vset.pattern.permute.xlu0 0
    %117 = vperm.xlu0 %116, %v83
    %v118 = vpop.permute.xlu0 %117
    %121 = vset.pattern.permute.xlu0 0
    %122 = vperm.xlu0 %121, %v84
    %v123 = vpop.permute.xlu0 %122
    %vm125 = vcmask 48128
    %v127 = vsel %vm125, %v69, 0
    %v130 = vsel %vm125, %v70, 0
    %v133 = vsel %vm125, %v71, 0
    %v136 = vsel %vm125, %v72, 0
    %v139 = vsel %vm125, %v73, 0
    %v142 = vsel %vm125, %v74, 0
    %v145 = vsel %vm125, %v75, 0
    %v148 = vsel %vm125, %v76, 0
    %vm150 = vcmask 1045504
    %v152 = vsel %vm150, %v35, 0
    %v155 = vsel %vm150, %v36, 0
    %157 = vmatprep.subr.mxu0 %v155
    %158 = vmatpush1.msra.mxu0 %v152
    %159 = vmatprep.subr.mxu0 0.0
    %160 = vmatpush1.msra.mxu0 0.0
    %161 = vmatprep.subr.mxu0 0.0
    %162 = vmatpush1.msra.mxu0 0.0
    %163 = vmatprep.subr.mxu0 0.0
    %164 = vmatpush1.msra.mxu0 0.0
    %165 = vmatprep.subr.mxu0 0.0
    %166 = vmatpush1.msra.mxu0 0.0
    %167 = vmatprep.subr.mxu0 0.0
    %168 = vmatpush1.msra.mxu0 0.0
    %169 = vmatprep.subr.mxu0 0.0
    %170 = vmatpush1.msra.mxu0 0.0
    %171 = vmatprep.subr.mxu0 0.0
    %172 = vmatpush1.msra.mxu0 0.0
    %173 = vmatprep.subr.mxu0 0.0
    %174 = vmatpush1.msra.mxu0 0.0
    %175 = vmatprep.subr.mxu0 0.0
    %176 = vmatpush1.msra.mxu0 0.0
    %177 = vmatprep.subr.mxu0 0.0
    %178 = vmatpush1.msra.mxu0 0.0
    %179 = vmatprep.subr.mxu0 0.0
    %180 = vmatpush1.msra.mxu0 0.0
    %181 = vmatprep.subr.mxu0 0.0
    %182 = vmatpush1.msra.mxu0 0.0
    %183 = vmatprep.subr.mxu0 0.0
    %184 = vmatpush1.msra.mxu0 0.0
    %185 = vmatprep.subr.mxu0 0.0
    %186 = vmatpush1.msra.mxu0 0.0
    %187 = vmatprep.subr.mxu0 0.0
    %188 = vmatpush1.msra.mxu0 0.0
    %189 = vmatprep.subr.mxu0 0.0
    %190 = vmatpush1.msra.mxu0 0.0
    %191 = vmatprep.subr.mxu0 0.0
    %192 = vmatpush1.msra.mxu0 0.0
    %193 = vmatprep.subr.mxu0 0.0
    %194 = vmatpush1.msra.mxu0 0.0
    %195 = vmatprep.subr.mxu0 0.0
    %196 = vmatpush1.msra.mxu0 0.0
    %197 = vmatprep.subr.mxu0 0.0
    %198 = vmatpush1.msra.mxu0 0.0
    %199 = vmatprep.subr.mxu0 0.0
    %200 = vmatpush1.msra.mxu0 0.0
    %201 = vmatprep.subr.mxu0 0.0
    %202 = vmatpush1.msra.mxu0 0.0
    %203 = vmatprep.subr.mxu0 0.0
    %204 = vmatpush1.msra.mxu0 0.0
    %205 = vmatprep.subr.mxu0 0.0
    %206 = vmatpush1.msra.mxu0 0.0
    %207 = vmatprep.subr.mxu0 0.0
    %208 = vmatpush1.msra.mxu0 0.0
    %209 = vmatprep.subr.mxu0 0.0
    %210 = vmatpush1.msra.mxu0 0.0
    %211 = vmatprep.subr.mxu0 0.0
    %212 = vmatpush1.msra.mxu0 0.0
    %213 = vmatprep.subr.mxu0 0.0
    %214 = vmatpush1.msra.mxu0 0.0
    %215 = vmatprep.subr.mxu0 0.0
    %216 = vmatpush1.msra.mxu0 0.0
    %217 = vmatprep.subr.mxu0 0.0
    %218 = vmatpush1.msra.mxu0 0.0
    %219 = vmatprep.subr.mxu0 0.0
    %220 = vmatpush1.msra.mxu0 0.0
    %221 = vmatprep.mubr.f32.mxu0 0.0
    %222 = vmatmul.mubr.f32.gmra.mrb[0].mxu0 %v127
    %v223 = vpop.f32.mrb[0].mxu0
    %v224 = vadd.f32 %v88, %v223
    %v225 = vpop.f32.mrb[0].mxu0
    %v226 = vadd.f32 %v88, %v225
    %227 = vmatprep.mubr.f32.mxu0 0.0
    %228 = vmatmul.mubr.f32.gmra.mrb[0].mxu0 %v130
    %v229 = vpop.f32.mrb[0].mxu0
    %v230 = vadd.f32 %v93, %v229
    %v231 = vpop.f32.mrb[0].mxu0
    %v232 = vadd.f32 %v93, %v231
    %233 = vmatprep.mubr.f32.mxu0 0.0
    %234 = vmatmul.mubr.f32.gmra.mrb[0].mxu0 %v133
    %v235 = vpop.f32.mrb[0].mxu0
    %v236 = vadd.f32 %v98, %v235
    %v237 = vpop.f32.mrb[0].mxu0
    %v238 = vadd.f32 %v98, %v237
    %239 = vmatprep.mubr.f32.mxu0 0.0
    %240 = vmatmul.mubr.f32.gmra.mrb[0].mxu0 %v136
    %v241 = vpop.f32.mrb[0].mxu0
    %v242 = vadd.f32 %v103, %v241
    %v243 = vpop.f32.mrb[0].mxu0
    %v244 = vadd.f32 %v103, %v243
    %245 = vmatprep.mubr.f32.mxu0 0.0
    %246 = vmatmul.mubr.f32.gmra.mrb[0].mxu0 %v139
    %v247 = vpop.f32.mrb[0].mxu0
    %v248 = vadd.f32 %v108, %v247
    %v249 = vpop.f32.mrb[0].mxu0
    %v250 = vadd.f32 %v108, %v249
    %251 = vmatprep.mubr.f32.mxu0 0.0
    %252 = vmatmul.mubr.f32.gmra.mrb[0].mxu0 %v142
    %v253 = vpop.f32.mrb[0].mxu0
    %v254 = vadd.f32 %v113, %v253
    %v255 = vpop.f32.mrb[0].mxu0
    %v256 = vadd.f32 %v113, %v255
    %257 = vmatprep.mubr.f32.mxu0 0.0
    %258 = vmatmul.mubr.f32.gmra.mrb[0].mxu0 %v145
    %v259 = vpop.f32.mrb[0].mxu0
    %v260 = vadd.f32 %v118, %v259
    %v261 = vpop.f32.mrb[0].mxu0
    %v262 = vadd.f32 %v118, %v261
    %263 = vmatprep.mubr.f32.mxu0 0.0
    %264 = vmatmul.mubr.f32.gmra.mrb[0].mxu0 %v148
    %v265 = vpop.f32.mrb[0].mxu0
    %v266 = vadd.f32 %v123, %v265
    %v267 = vpop.f32.mrb[0].mxu0
    %v268 = vadd.f32 %v123, %v267
    %269 = vdwg.mxu0
    %v270 = vmax.f32 %v224, 0.0
    %v271 = vmax.f32 %v226, 0.0
    %v272 = vmax.f32 %v230, 0.0
    %v273 = vmax.f32 %v232, 0.0
    %v274 = vmax.f32 %v236, 0.0
    %v275 = vmax.f32 %v238, 0.0
    %v276 = vmax.f32 %v242, 0.0
    %v277 = vmax.f32 %v244, 0.0
    %v278 = vmax.f32 %v248, 0.0
    %v279 = vmax.f32 %v250, 0.0
    %v280 = vmax.f32 %v254, 0.0
    %v281 = vmax.f32 %v256, 0.0
    %v282 = vmax.f32 %v260, 0.0
    %v283 = vmax.f32 %v262, 0.0
    %v284 = vmax.f32 %v266, 0.0
    %v285 = vmax.f32 %v268, 0.0
    %v286 = vld [vmem:[%s3] sm:$0xff]
    %v287 = vld [vmem:[%s3 + $0x8] sm:$0xff]
    %v288 = vld [vmem:[%s3 + $0x10] sm:$0xff]
    %v289 = vld [vmem:[%s3 + $0x18] sm:$0xff]
    %v290 = vld [vmem:[%s3 + $0x20] sm:$0xff]
    %v291 = vld [vmem:[%s3 + $0x28] sm:$0xff]
    %v292 = vld [vmem:[%s3 + $0x30] sm:$0xff]
    %v293 = vld [vmem:[%s3 + $0x38] sm:$0xff]
    %v294 = vld [vmem:[%s3 + $0x40] sm:$0xff]
    %v295 = vld [vmem:[%s3 + $0x48] sm:$0xff]
    %v296 = vld [vmem:[%s3 + $0x50] sm:$0xff]
    %v297 = vld [vmem:[%s3 + $0x58] sm:$0xff]
    %v298 = vld [vmem:[%s3 + $0x60] sm:$0xff]
    %v299 = vld [vmem:[%s3 + $0x68] sm:$0xff]
    %v300 = vld [vmem:[%s3 + $0x70] sm:$0xff]
    %v301 = vld [vmem:[%s3 + $0x78] sm:$0xff]
    %v302 = vld [vmem:[%s4] sm:$0xff]
    %v303 = vld [vmem:[%s4 + $0x8] sm:$0xff]
    %v304 = vld [vmem:[%s4 + $0x10] sm:$0xff]
    %v305 = vld [vmem:[%s4 + $0x18] sm:$0xff]
    %v306 = vld [vmem:[%s4 + $0x20] sm:$0xff]
    %v307 = vld [vmem:[%s4 + $0x28] sm:$0xff]
    %v308 = vld [vmem:[%s4 + $0x30] sm:$0xff]
    %v309 = vld [vmem:[%s4 + $0x38] sm:$0xff]
    %v310 = vld [vmem:[%s4 + $0x40] sm:$0xff]
    %v311 = vld [vmem:[%s4 + $0x48] sm:$0xff]
    %v312 = vld [vmem:[%s4 + $0x50] sm:$0xff]
    %v313 = vld [vmem:[%s4 + $0x58] sm:$0xff]
    %v314 = vld [vmem:[%s4 + $0x60] sm:$0xff]
    %v315 = vld [vmem:[%s4 + $0x68] sm:$0xff]
    %v316 = vld [vmem:[%s4 + $0x70] sm:$0xff]
    %v317 = vld [vmem:[%s4 + $0x78] sm:$0xff]
    %319 = vset.pattern.permute.xlu0 0
    %320 = vperm.xlu0 %319, %v302
    %v321 = vpop.permute.xlu0 %320
    %324 = vset.pattern.permute.xlu0 0
    %325 = vperm.xlu0 %324, %v303
    %v326 = vpop.permute.xlu0 %325
    %329 = vset.pattern.permute.xlu0 0
    %330 = vperm.xlu0 %329, %v304
    %v331 = vpop.permute.xlu0 %330
    %334 = vset.pattern.permute.xlu0 0
    %335 = vperm.xlu0 %334, %v305
    %v336 = vpop.permute.xlu0 %335
    %339 = vset.pattern.permute.xlu0 0
    %340 = vperm.xlu0 %339, %v306
    %v341 = vpop.permute.xlu0 %340
    %344 = vset.pattern.permute.xlu0 0
    %345 = vperm.xlu0 %344, %v307
    %v346 = vpop.permute.xlu0 %345
    %349 = vset.pattern.permute.xlu0 0
    %350 = vperm.xlu0 %349, %v308
    %v351 = vpop.permute.xlu0 %350
    %354 = vset.pattern.permute.xlu0 0
    %355 = vperm.xlu0 %354, %v309
    %v356 = vpop.permute.xlu0 %355
    %359 = vset.pattern.permute.xlu0 0
    %360 = vperm.xlu0 %359, %v310
    %v361 = vpop.permute.xlu0 %360
    %364 = vset.pattern.permute.xlu0 0
    %365 = vperm.xlu0 %364, %v311
    %v366 = vpop.permute.xlu0 %365
    %369 = vset.pattern.permute.xlu0 0
    %370 = vperm.xlu0 %369, %v312
    %v371 = vpop.permute.xlu0 %370
    %374 = vset.pattern.permute.xlu0 0
    %375 = vperm.xlu0 %374, %v313
    %v376 = vpop.permute.xlu0 %375
    %379 = vset.pattern.permute.xlu0 0
    %380 = vperm.xlu0 %379, %v314
    %v381 = vpop.permute.xlu0 %380
    %384 = vset.pattern.permute.xlu0 0
    %385 = vperm.xlu0 %384, %v315
    %v386 = vpop.permute.xlu0 %385
    %389 = vset.pattern.permute.xlu0 0
    %390 = vperm.xlu0 %389, %v316
    %v391 = vpop.permute.xlu0 %390
    %394 = vset.pattern.permute.xlu0 0
    %395 = vperm.xlu0 %394, %v317
    %v396 = vpop.permute.xlu0 %395
    %vm398 = vcmask 523264
    %v400 = vsel %vm398, %v286, 0
    %v403 = vsel %vm398, %v287, 0
    %v406 = vsel %vm398, %v288, 0
    %v409 = vsel %vm398, %v289, 0
    %v412 = vsel %vm398, %v290, 0
    %v415 = vsel %vm398, %v291, 0
    %v418 = vsel %vm398, %v292, 0
    %v421 = vsel %vm398, %v293, 0
    %v424 = vsel %vm398, %v294, 0
    %v427 = vsel %vm398, %v295, 0
    %v430 = vsel %vm398, %v296, 0
    %v433 = vsel %vm398, %v297, 0
    %v436 = vsel %vm398, %v298, 0
    %v439 = vsel %vm398, %v299, 0
    %v442 = vsel %vm398, %v300, 0
    %v445 = vsel %vm398, %v301, 0
    %447 = vmatprep.subr.mxu0 %v271
    %448 = vmatpush1.msra.mxu0 %v270
    %449 = vmatprep.subr.mxu0 %v273
    %450 = vmatpush1.msra.mxu0 %v272
    %451 = vmatprep.subr.mxu0 %v275
    %452 = vmatpush1.msra.mxu0 %v274
    %453 = vmatprep.subr.mxu0 %v277
    %454 = vmatpush1.msra.mxu0 %v276
    %455 = vmatprep.subr.mxu0 %v279
    %456 = vmatpush1.msra.mxu0 %v278
    %457 = vmatprep.subr.mxu0 %v281
    %458 = vmatpush1.msra.mxu0 %v280
    %459 = vmatprep.subr.mxu0 %v283
    %460 = vmatpush1.msra.mxu0 %v282
    %461 = vmatprep.subr.mxu0 %v285
    %462 = vmatpush1.msra.mxu0 %v284
    %463 = vmatprep.subr.mxu0 0.0
    %464 = vmatpush1.msra.mxu0 0.0
    %465 = vmatprep.subr.mxu0 0.0
    %466 = vmatpush1.msra.mxu0 0.0
    %467 = vmatprep.subr.mxu0 0.0
    %468 = vmatpush1.msra.mxu0 0.0
    %469 = vmatprep.subr.mxu0 0.0
    %470 = vmatpush1.msra.mxu0 0.0
    %471 = vmatprep.subr.mxu0 0.0
    %472 = vmatpush1.msra.mxu0 0.0
    %473 = vmatprep.subr.mxu0 0.0
    %474 = vmatpush1.msra.mxu0 0.0
    %475 = vmatprep.subr.mxu0 0.0
    %476 = vmatpush1.msra.mxu0 0.0
    %477 = vmatprep.subr.mxu0 0.0
    %478 = vmatpush1.msra.mxu0 0.0
    %479 = vmatprep.subr.mxu0 0.0
    %480 = vmatpush1.msra.mxu0 0.0
    %481 = vmatprep.subr.mxu0 0.0
    %482 = vmatpush1.msra.mxu0 0.0
    %483 = vmatprep.subr.mxu0 0.0
    %484 = vmatpush1.msra.mxu0 0.0
    %485 = vmatprep.subr.mxu0 0.0
    %486 = vmatpush1.msra.mxu0 0.0
    %487 = vmatprep.subr.mxu0 0.0
    %488 = vmatpush1.msra.mxu0 0.0
    %489 = vmatprep.subr.mxu0 0.0
    %490 = vmatpush1.msra.mxu0 0.0
    %491 = vmatprep.subr.mxu0 0.0
    %492 = vmatpush1.msra.mxu0 0.0
    %493 = vmatprep.subr.mxu0 0.0
    %494 = vmatpush1.msra.mxu0 0.0
    %495 = vmatprep.subr.mxu0 0.0
    %496 = vmatpush1.msra.mxu0 0.0
    %497 = vmatprep.subr.mxu0 0.0
    %498 = vmatpush1.msra.mxu0 0.0
    %499 = vmatprep.subr.mxu0 0.0
    %500 = vmatpush1.msra.mxu0 0.0
    %501 = vmatprep.subr.mxu0 0.0
    %502 = vmatpush1.msra.mxu0 0.0
    %503 = vmatprep.subr.mxu0 0.0
    %504 = vmatpush1.msra.mxu0 0.0
    %505 = vmatprep.subr.mxu0 0.0
    %506 = vmatpush1.msra.mxu0 0.0
    %507 = vmatprep.subr.mxu0 0.0
    %508 = vmatpush1.msra.mxu0 0.0
    %509 = vmatprep.subr.mxu0 0.0
    %510 = vmatpush1.msra.mxu0 0.0
    %511 = vmatprep.mubr.f32.mxu0 0.0
    %512 = vmatmul.mubr.f32.gmra.mrb[0].mxu0 %v400
    %v513 = vpop.f32.mrb[0].mxu0
    %v514 = vadd.f32 %v321, %v513
    %v515 = vpop.f32.mrb[0].mxu0
    %v516 = vadd.f32 %v321, %v515
    %517 = vmatprep.mubr.f32.mxu0 0.0
    %518 = vmatmul.mubr.f32.gmra.mrb[0].mxu0 %v403
    %v519 = vpop.f32.mrb[0].mxu0
    %v520 = vadd.f32 %v326, %v519
    %v521 = vpop.f32.mrb[0].mxu0
    %v522 = vadd.f32 %v326, %v521
    %523 = vmatprep.mubr.f32.mxu0 0.0
    %524 = vmatmul.mubr.f32.gmra.mrb[0].mxu0 %v406
    %v525 = vpop.f32.mrb[0].mxu0
    %v526 = vadd.f32 %v331, %v525
    %v527 = vpop.f32.mrb[0].mxu0
    %v528 = vadd.f32 %v331, %v527
    %529 = vmatprep.mubr.f32.mxu0 0.0
    %530 = vmatmul.mubr.f32.gmra.mrb[0].mxu0 %v409
    %v531 = vpop.f32.mrb[0].mxu0
    %v532 = vadd.f32 %v336, %v531
    %v533 = vpop.f32.mrb[0].mxu0
    %v534 = vadd.f32 %v336, %v533
    %535 = vmatprep.mubr.f32.mxu0 0.0
    %536 = vmatmul.mubr.f32.gmra.mrb[0].mxu0 %v412
    %v537 = vpop.f32.mrb[0].mxu0
    %v538 = vadd.f32 %v341, %v537
    %v539 = vpop.f32.mrb[0].mxu0
    %v540 = vadd.f32 %v341, %v539
    %541 = vmatprep.mubr.f32.mxu0 0.0
    %542 = vmatmul.mubr.f32.gmra.mrb[0].mxu0 %v415
    %v543 = vpop.f32.mrb[0].mxu0
    %v544 = vadd.f32 %v346, %v543
    %v545 = vpop.f32.mrb[0].mxu0
    %v546 = vadd.f32 %v346, %v545
    %547 = vmatprep.mubr.f32.mxu0 0.0
    %548 = vmatmul.mubr.f32.gmra.mrb[0].mxu0 %v418
    %v549 = vpop.f32.mrb[0].mxu0
    %v550 = vadd.f32 %v351, %v549
    %v551 = vpop.f32.mrb[0].mxu0
    %v552 = vadd.f32 %v351, %v551
    %553 = vmatprep.mubr.f32.mxu0 0.0
    %554 = vmatmul.mubr.f32.gmra.mrb[0].mxu0 %v421
    %v555 = vpop.f32.mrb[0].mxu0
    %v556 = vadd.f32 %v356, %v555
    %v557 = vpop.f32.mrb[0].mxu0
    %v558 = vadd.f32 %v356, %v557
    %559 = vmatprep.mubr.f32.mxu0 0.0
    %560 = vmatmul.mubr.f32.gmra.mrb[0].mxu0 %v424
    %v561 = vpop.f32.mrb[0].mxu0
    %v562 = vadd.f32 %v361, %v561
    %v563 = vpop.f32.mrb[0].mxu0
    %v564 = vadd.f32 %v361, %v563
    %565 = vmatprep.mubr.f32.mxu0 0.0
    %566 = vmatmul.mubr.f32.gmra.mrb[0].mxu0 %v427
    %v567 = vpop.f32.mrb[0].mxu0
    %v568 = vadd.f32 %v366, %v567
    %v569 = vpop.f32.mrb[0].mxu0
    %v570 = vadd.f32 %v366, %v569
    %571 = vmatprep.mubr.f32.mxu0 0.0
    %572 = vmatmul.mubr.f32.gmra.mrb[0].mxu0 %v430
    %v573 = vpop.f32.mrb[0].mxu0
    %v574 = vadd.f32 %v371, %v573
    %v575 = vpop.f32.mrb[0].mxu0
    %v576 = vadd.f32 %v371, %v575
    %577 = vmatprep.mubr.f32.mxu0 0.0
    %578 = vmatmul.mubr.f32.gmra.mrb[0].mxu0 %v433
    %v579 = vpop.f32.mrb[0].mxu0
    %v580 = vadd.f32 %v376, %v579
    %v581 = vpop.f32.mrb[0].mxu0
    %v582 = vadd.f32 %v376, %v581
    %583 = vmatprep.mubr.f32.mxu0 0.0
    %584 = vmatmul.mubr.f32.gmra.mrb[0].mxu0 %v436
    %v585 = vpop.f32.mrb[0].mxu0
    %v586 = vadd.f32 %v381, %v585
    %v587 = vpop.f32.mrb[0].mxu0
    %v588 = vadd.f32 %v381, %v587
    %589 = vmatprep.mubr.f32.mxu0 0.0
    %590 = vmatmul.mubr.f32.gmra.mrb[0].mxu0 %v439
    %v591 = vpop.f32.mrb[0].mxu0
    %v592 = vadd.f32 %v386, %v591
    %v593 = vpop.f32.mrb[0].mxu0
    %v594 = vadd.f32 %v386, %v593
    %595 = vmatprep.mubr.f32.mxu0 0.0
    %596 = vmatmul.mubr.f32.gmra.mrb[0].mxu0 %v442
    %v597 = vpop.f32.mrb[0].mxu0
    %v598 = vadd.f32 %v391, %v597
    %v599 = vpop.f32.mrb[0].mxu0
    %v600 = vadd.f32 %v391, %v599
    %601 = vmatprep.mubr.f32.mxu0 0.0
    %602 = vmatmul.mubr.f32.gmra.mrb[0].mxu0 %v445
    %v603 = vpop.f32.mrb[0].mxu0
    %v604 = vadd.f32 %v396, %v603
    %v605 = vpop.f32.mrb[0].mxu0
    %v606 = vadd.f32 %v396, %v605
    %607 = vdwg.mxu0
    %v608 = vmax.f32 %v514, 0.0
    %v609 = vmax.f32 %v516, 0.0
    %v610 = vmax.f32 %v520, 0.0
    %v611 = vmax.f32 %v522, 0.0
    %v612 = vmax.f32 %v526, 0.0
    %v613 = vmax.f32 %v528, 0.0
    %v614 = vmax.f32 %v532, 0.0
    %v615 = vmax.f32 %v534, 0.0
    %v616 = vmax.f32 %v538, 0.0
    %v617 = vmax.f32 %v540, 0.0
    %v618 = vmax.f32 %v544, 0.0
    %v619 = vmax.f32 %v546, 0.0
    %v620 = vmax.f32 %v550, 0.0
    %v621 = vmax.f32 %v552, 0.0
    %v622 = vmax.f32 %v556, 0.0
    %v623 = vmax.f32 %v558, 0.0
    %v624 = vmax.f32 %v562, 0.0
    %v625 = vmax.f32 %v564, 0.0
    %v626 = vmax.f32 %v568, 0.0
    %v627 = vmax.f32 %v570, 0.0
    %v628 = vmax.f32 %v574, 0.0
    %v629 = vmax.f32 %v576, 0.0
    %v630 = vmax.f32 %v580, 0.0
    %v631 = vmax.f32 %v582, 0.0
    %v632 = vmax.f32 %v586, 0.0
    %v633 = vmax.f32 %v588, 0.0
    %v634 = vmax.f32 %v592, 0.0
    %v635 = vmax.f32 %v594, 0.0
    %v636 = vmax.f32 %v598, 0.0
    %v637 = vmax.f32 %v600, 0.0
    %v638 = vmax.f32 %v604, 0.0
    %v639 = vmax.f32 %v606, 0.0
    %v640 = vld [vmem:[%s5] sm:$0xff]
    %v641 = vld [vmem:[%s5 + $0x8] sm:$0xff]
    %v642 = vld [vmem:[%s5 + $0x10] sm:$0xff]
    %v643 = vld [vmem:[%s5 + $0x18] sm:$0xff]
    %v644 = vld [vmem:[%s5 + $0x20] sm:$0xff]
    %v645 = vld [vmem:[%s5 + $0x28] sm:$0xff]
    %v646 = vld [vmem:[%s5 + $0x30] sm:$0xff]
    %v647 = vld [vmem:[%s5 + $0x38] sm:$0xff]
    %v648 = vld [vmem:[%s6] sm:$0xff]
    %v649 = vld [vmem:[%s6 + $0x8] sm:$0xff]
    %v650 = vld [vmem:[%s6 + $0x10] sm:$0xff]
    %v651 = vld [vmem:[%s6 + $0x18] sm:$0xff]
    %v652 = vld [vmem:[%s6 + $0x20] sm:$0xff]
    %v653 = vld [vmem:[%s6 + $0x28] sm:$0xff]
    %v654 = vld [vmem:[%s6 + $0x30] sm:$0xff]
    %v655 = vld [vmem:[%s6 + $0x38] sm:$0xff]
    %657 = vset.pattern.permute.xlu0 0
    %658 = vperm.xlu0 %657, %v648
    %v659 = vpop.permute.xlu0 %658
    %662 = vset.pattern.permute.xlu0 0
    %663 = vperm.xlu0 %662, %v649
    %v664 = vpop.permute.xlu0 %663
    %667 = vset.pattern.permute.xlu0 0
    %668 = vperm.xlu0 %667, %v650
    %v669 = vpop.permute.xlu0 %668
    %672 = vset.pattern.permute.xlu0 0
    %673 = vperm.xlu0 %672, %v651
    %v674 = vpop.permute.xlu0 %673
    %677 = vset.pattern.permute.xlu0 0
    %678 = vperm.xlu0 %677, %v652
    %v679 = vpop.permute.xlu0 %678
    %682 = vset.pattern.permute.xlu0 0
    %683 = vperm.xlu0 %682, %v653
    %v684 = vpop.permute.xlu0 %683
    %687 = vset.pattern.permute.xlu0 0
    %688 = vperm.xlu0 %687, %v654
    %v689 = vpop.permute.xlu0 %688
    %692 = vset.pattern.permute.xlu0 0
    %693 = vperm.xlu0 %692, %v655
    %v694 = vpop.permute.xlu0 %693
    %696 = vmatprep.subr.mxu0 %v609
    %697 = vmatpush1.msra.mxu0 %v608
    %698 = vmatprep.subr.mxu0 %v611
    %699 = vmatpush1.msra.mxu0 %v610
    %700 = vmatprep.subr.mxu0 %v613
    %701 = vmatpush1.msra.mxu0 %v612
    %702 = vmatprep.subr.mxu0 %v615
    %703 = vmatpush1.msra.mxu0 %v614
    %704 = vmatprep.subr.mxu0 %v617
    %705 = vmatpush1.msra.mxu0 %v616
    %706 = vmatprep.subr.mxu0 %v619
    %707 = vmatpush1.msra.mxu0 %v618
    %708 = vmatprep.subr.mxu0 %v621
    %709 = vmatpush1.msra.mxu0 %v620
    %710 = vmatprep.subr.mxu0 %v623
    %711 = vmatpush1.msra.mxu0 %v622
    %712 = vmatprep.subr.mxu0 %v625
    %713 = vmatpush1.msra.mxu0 %v624
    %714 = vmatprep.subr.mxu0 %v627
    %715 = vmatpush1.msra.mxu0 %v626
    %716 = vmatprep.subr.mxu0 %v629
    %717 = vmatpush1.msra.mxu0 %v628
    %718 = vmatprep.subr.mxu0 %v631
    %719 = vmatpush1.msra.mxu0 %v630
    %720 = vmatprep.subr.mxu0 %v633
    %721 = vmatpush1.msra.mxu0 %v632
    %722 = vmatprep.subr.mxu0 %v635
    %723 = vmatpush1.msra.mxu0 %v634
    %724 = vmatprep.subr.mxu0 %v637
    %725 = vmatpush1.msra.mxu0 %v636
    %726 = vmatprep.subr.mxu0 %v639
    %727 = vmatpush1.msra.mxu0 %v638
    %728 = vmatprep.subr.mxu0 0.0
    %729 = vmatpush1.msra.mxu0 0.0
    %730 = vmatprep.subr.mxu0 0.0
    %731 = vmatpush1.msra.mxu0 0.0
    %732 = vmatprep.subr.mxu0 0.0
    %733 = vmatpush1.msra.mxu0 0.0
    %734 = vmatprep.subr.mxu0 0.0
    %735 = vmatpush1.msra.mxu0 0.0
    %736 = vmatprep.subr.mxu0 0.0
    %737 = vmatpush1.msra.mxu0 0.0
    %738 = vmatprep.subr.mxu0 0.0
    %739 = vmatpush1.msra.mxu0 0.0
    %740 = vmatprep.subr.mxu0 0.0
    %741 = vmatpush1.msra.mxu0 0.0
    %742 = vmatprep.subr.mxu0 0.0
    %743 = vmatpush1.msra.mxu0 0.0
    %744 = vmatprep.subr.mxu0 0.0
    %745 = vmatpush1.msra.mxu0 0.0
    %746 = vmatprep.subr.mxu0 0.0
    %747 = vmatpush1.msra.mxu0 0.0
    %748 = vmatprep.subr.mxu0 0.0
    %749 = vmatpush1.msra.mxu0 0.0
    %750 = vmatprep.subr.mxu0 0.0
    %751 = vmatpush1.msra.mxu0 0.0
    %752 = vmatprep.subr.mxu0 0.0
    %753 = vmatpush1.msra.mxu0 0.0
    %754 = vmatprep.subr.mxu0 0.0
    %755 = vmatpush1.msra.mxu0 0.0
    %756 = vmatprep.subr.mxu0 0.0
    %757 = vmatpush1.msra.mxu0 0.0
    %758 = vmatprep.subr.mxu0 0.0
    %759 = vmatpush1.msra.mxu0 0.0
    %760 = vmatprep.mubr.f32.mxu0 0.0
    %761 = vmatmul.mubr.f32.gmra.mrb[0].mxu0 %v640
    %v762 = vpop.f32.mrb[0].mxu0
    %v763 = vadd.f32 %v659, %v762
    %v764 = vpop.f32.mrb[0].mxu0
    %v765 = vadd.f32 %v659, %v764
    %766 = vmatprep.mubr.f32.mxu0 0.0
    %767 = vmatmul.mubr.f32.gmra.mrb[0].mxu0 %v641
    %v768 = vpop.f32.mrb[0].mxu0
    %v769 = vadd.f32 %v664, %v768
    %v770 = vpop.f32.mrb[0].mxu0
    %v771 = vadd.f32 %v664, %v770
    %772 = vmatprep.mubr.f32.mxu0 0.0
    %773 = vmatmul.mubr.f32.gmra.mrb[0].mxu0 %v642
    %v774 = vpop.f32.mrb[0].mxu0
    %v775 = vadd.f32 %v669, %v774
    %v776 = vpop.f32.mrb[0].mxu0
    %v777 = vadd.f32 %v669, %v776
    %778 = vmatprep.mubr.f32.mxu0 0.0
    %779 = vmatmul.mubr.f32.gmra.mrb[0].mxu0 %v643
    %v780 = vpop.f32.mrb[0].mxu0
    %v781 = vadd.f32 %v674, %v780
    %v782 = vpop.f32.mrb[0].mxu0
    %v783 = vadd.f32 %v674, %v782
    %784 = vmatprep.mubr.f32.mxu0 0.0
    %785 = vmatmul.mubr.f32.gmra.mrb[0].mxu0 %v644
    %v786 = vpop.f32.mrb[0].mxu0
    %v787 = vadd.f32 %v679, %v786
    %v788 = vpop.f32.mrb[0].mxu0
    %v789 = vadd.f32 %v679, %v788
    %790 = vmatprep.mubr.f32.mxu0 0.0
    %791 = vmatmul.mubr.f32.gmra.mrb[0].mxu0 %v645
    %v792 = vpop.f32.mrb[0].mxu0
    %v793 = vadd.f32 %v684, %v792
    %v794 = vpop.f32.mrb[0].mxu0
    %v795 = vadd.f32 %v684, %v794
    %796 = vmatprep.mubr.f32.mxu0 0.0
    %797 = vmatmul.mubr.f32.gmra.mrb[0].mxu0 %v646
    %v798 = vpop.f32.mrb[0].mxu0
    %v799 = vadd.f32 %v689, %v798
    %v800 = vpop.f32.mrb[0].mxu0
    %v801 = vadd.f32 %v689, %v800
    %802 = vmatprep.mubr.f32.mxu0 0.0
    %803 = vmatmul.mubr.f32.gmra.mrb[0].mxu0 %v647
    %v804 = vpop.f32.mrb[0].mxu0
    %v805 = vadd.f32 %v694, %v804
    %v806 = vpop.f32.mrb[0].mxu0
    %v807 = vadd.f32 %v694, %v806
    %808 = vdwg.mxu0
    %v809 = vmax.f32 %v763, 0.0
    %v810 = vmax.f32 %v765, 0.0
    %v811 = vmax.f32 %v769, 0.0
    %v812 = vmax.f32 %v771, 0.0
    %v813 = vmax.f32 %v775, 0.0
    %v814 = vmax.f32 %v777, 0.0
    %v815 = vmax.f32 %v781, 0.0
    %v816 = vmax.f32 %v783, 0.0
    %v817 = vmax.f32 %v787, 0.0
    %v818 = vmax.f32 %v789, 0.0
    %v819 = vmax.f32 %v793, 0.0
    %v820 = vmax.f32 %v795, 0.0
    %v821 = vmax.f32 %v799, 0.0
    %v822 = vmax.f32 %v801, 0.0
    %v823 = vmax.f32 %v805, 0.0
    %v824 = vmax.f32 %v807, 0.0
    %v825 = vld [vmem:[%s7] sm:$0x1]
    %v826 = vld [vmem:[#allocation2] sm:$0x1]
    %828 = vset.pattern.permute.xlu0 0
    %829 = vperm.xlu0 %828, %v826
    %v830 = vpop.permute.xlu0 %829
    %v832 = vlaneseq
    %v833 = vshrl.u32 %v832, 7
    %v834 = vsub.s32 0, %v833
    %v835 = vrot.slane %v830, %v834
    %v837 = vsel %vm398, %v825, 0
    %839 = vmatprep.subr.mxu0 %v810
    %840 = vmatpush1.msra.mxu0 %v809
    %841 = vmatprep.subr.mxu0 %v812
    %842 = vmatpush1.msra.mxu0 %v811
    %843 = vmatprep.subr.mxu0 %v814
    %844 = vmatpush1.msra.mxu0 %v813
    %845 = vmatprep.subr.mxu0 %v816
    %846 = vmatpush1.msra.mxu0 %v815
    %847 = vmatprep.subr.mxu0 %v818
    %848 = vmatpush1.msra.mxu0 %v817
    %849 = vmatprep.subr.mxu0 %v820
    %850 = vmatpush1.msra.mxu0 %v819
    %851 = vmatprep.subr.mxu0 %v822
    %852 = vmatpush1.msra.mxu0 %v821
    %853 = vmatprep.subr.mxu0 %v824
    %854 = vmatpush1.msra.mxu0 %v823
    %855 = vmatprep.subr.mxu0 0.0
    %856 = vmatpush1.msra.mxu0 0.0
    %857 = vmatprep.subr.mxu0 0.0
    %858 = vmatpush1.msra.mxu0 0.0
    %859 = vmatprep.subr.mxu0 0.0
    %860 = vmatpush1.msra.mxu0 0.0
    %861 = vmatprep.subr.mxu0 0.0
    %862 = vmatpush1.msra.mxu0 0.0
    %863 = vmatprep.subr.mxu0 0.0
    %864 = vmatpush1.msra.mxu0 0.0
    %865 = vmatprep.subr.mxu0 0.0
    %866 = vmatpush1.msra.mxu0 0.0
    %867 = vmatprep.subr.mxu0 0.0
    %868 = vmatpush1.msra.mxu0 0.0
    %869 = vmatprep.subr.mxu0 0.0
    %870 = vmatpush1.msra.mxu0 0.0
    %871 = vmatprep.subr.mxu0 0.0
    %872 = vmatpush1.msra.mxu0 0.0
    %873 = vmatprep.subr.mxu0 0.0
    %874 = vmatpush1.msra.mxu0 0.0
    %875 = vmatprep.subr.mxu0 0.0
    %876 = vmatpush1.msra.mxu0 0.0
    %877 = vmatprep.subr.mxu0 0.0
    %878 = vmatpush1.msra.mxu0 0.0
    %879 = vmatprep.subr.mxu0 0.0
    %880 = vmatpush1.msra.mxu0 0.0
    %881 = vmatprep.subr.mxu0 0.0
    %882 = vmatpush1.msra.mxu0 0.0
    %883 = vmatprep.subr.mxu0 0.0
    %884 = vmatpush1.msra.mxu0 0.0
    %885 = vmatprep.subr.mxu0 0.0
    %886 = vmatpush1.msra.mxu0 0.0
    %887 = vmatprep.subr.mxu0 0.0
    %888 = vmatpush1.msra.mxu0 0.0
    %889 = vmatprep.subr.mxu0 0.0
    %890 = vmatpush1.msra.mxu0 0.0
    %891 = vmatprep.subr.mxu0 0.0
    %892 = vmatpush1.msra.mxu0 0.0
    %893 = vmatprep.subr.mxu0 0.0
    %894 = vmatpush1.msra.mxu0 0.0
    %895 = vmatprep.subr.mxu0 0.0
    %896 = vmatpush1.msra.mxu0 0.0
    %897 = vmatprep.subr.mxu0 0.0
    %898 = vmatpush1.msra.mxu0 0.0
    %899 = vmatprep.subr.mxu0 0.0
    %900 = vmatpush1.msra.mxu0 0.0
    %901 = vmatprep.subr.mxu0 0.0
    %902 = vmatpush1.msra.mxu0 0.0
    %903 = vmatprep.mubr.f32.mxu0 0.0
    %904 = vmatmul.mubr.f32.gmra.mrb[0].mxu0 %v837
    %v905 = vpop.f32.mrb[0].mxu0
    %v906 = vadd.f32 %v835, %v905
    %v907 = vpop.f32.mrb[0].mxu0
    %v908 = vadd.f32 %v835, %v907
    %909 = vdwg.mxu0
    %v910 = vmul.f32 %v906, %v67
    %v911 = vmul.f32 %v908, %v68
    %v914 = vrot.slane %v67, 7
    %v915 = vrot.slane %v68, 7
    %vm918 = vcmask 1040384
    %v919 = vsel %vm918, %v910, %v914
    %v920 = vsel %vm918, %v911, %v915
    %v923 = vcombine.low %v919, %v920
    %v925 = vunpack.c.l.s4 1983009808
    %v926 = vunpack.c.0.s8 %v925
    %v927 = vlaneseq
    %v928 = vshrl.u32 %v927, 7
    %v929 = vsub.s32 %v926, %v928
    %v930 = vrot.slane %v923, %v929
    %932 = vst [vmem:[#allocation3] sm:$0xf] %v930
    // Predicated region
    $region38: #{tpu_custom_call.1} parent=1 // pred_check
      _
    $region39: #{tpu_custom_call.1} parent=1 // pred_check_branch
      %934 = sbr.rel (0) target = $region41
    $region40: #{tpu_custom_call.1} parent=1 // pred_region
      %s936 = ssub.s32 64, 64
      %937 = vsyncadd [#allocation4], %s936
      %s939 = sshll.u32 [#allocation3], 4
      %s940 = int_to_ptr.vmem [resolvable:$true] %s939
      %942 = dma.vmem_to_hbm [thread:$0]  %s940, 64, %s9, [#allocation4]
    $region41: #{tpu_custom_call.1} parent=1 // pred_fallthru
      _
    // Predicated region
    $region42: #{tpu_custom_call.1} parent=1 // pred_check
      _
    $region43: #{tpu_custom_call.1} parent=1 // pred_check_branch
      %944 = sbr.rel (0) target = $region45
    $region44: #{tpu_custom_call.1} parent=1 // pred_region
      %945 = dma.done [#allocation4], 64
    $region45: #{tpu_custom_call.1} parent=1 // pred_fallthru
      _
    %946 = vsyncpa [#allocation4], 1

</llo_original>
